<compile_context>
chip_gen: v5e
topology: v5e:2x2
jax: 0.10.0
libtpu: 0.0.40
codegen_flags: <defaults>
</compile_context>

<pallas_src>
import functools

import jax
import jax.numpy as jnp
from jax.experimental import pallas as pl
from jax.experimental.pallas import tpu as pltpu

LANE = 128   # vreg lane width
SUB_B = 16   # batch-tile granularity (safe sublane packing for the bf16 x tiles)


def _round_up(x, m):
    return (x + m - 1) // m * m


def ractor_kernel(x_ref, w1_ref, b1_ref, w2_ref, b2_ref, w3_ref, b3_ref, out_ref):
    """Fused 3-layer MLP on one batch tile.

    bf16 MXU operands, f32 accumulation / bias-add / ReLU, narrow (tb, A) f32 store.
    """
    x = x_ref[...]                                                             # (tb, Kp)  bf16
    h1 = jnp.dot(x, w1_ref[...], preferred_element_type=jnp.float32) + b1_ref[...]
    h1 = jnp.maximum(h1, 0.0).astype(jnp.bfloat16)                             # (tb, H1p)
    h2 = jnp.dot(h1, w2_ref[...], preferred_element_type=jnp.float32) + b2_ref[...]
    h2 = jnp.maximum(h2, 0.0).astype(jnp.bfloat16)                             # (tb, H2p)
    logits = jnp.dot(h2, w3_ref[...], preferred_element_type=jnp.float32) + b3_ref[...]
    out_ref[...] = logits.astype(out_ref.dtype)                                # (tb, A)


def _pad_params(params):
    """Pad + cast parameters once (called by make_ractor_forward, not per step).

    * layer-1 fan-in padded to a multiple of 8 only (keeps x HBM bytes minimal),
    * hidden dims padded to 128 lanes (full vregs; weights are resident so it's free),
    * output dim A left UNPADDED (narrow lane-true store in the kernel),
    * weights -> bf16 (MXU operands), biases stay f32 (added post-accumulation).
    Zero padding is exact: padded units see zero weights + zero bias, relu(0)=0, and the
    corresponding rows of the next weight matrix are zero.
    """
    W1, b1 = params["W1"], params["b1"]
    W2, b2 = params["W2"], params["b2"]
    W3, b3 = params["W3"], params["b3"]
    K, H1 = W1.shape
    H2 = W2.shape[1]
    A = W3.shape[1]
    Kp = _round_up(K, 8)
    H1p = _round_up(H1, LANE)
    H2p = _round_up(H2, LANE)

    def pad2(a, r, c):
        return jnp.pad(a, ((0, r - a.shape[0]), (0, c - a.shape[1])))

    padded = {
        "W1": pad2(W1, Kp, H1p).astype(jnp.bfloat16),
        "b1": pad2(b1, 1, H1p).astype(jnp.float32),
        "W2": pad2(W2, H1p, H2p).astype(jnp.bfloat16),
        "b2": pad2(b2, 1, H2p).astype(jnp.float32),
        "W3": pad2(W3, H2p, A).astype(jnp.bfloat16),
        "b3": pad2(b3, 1, A).astype(jnp.float32),
    }
    meta = (K, A, Kp, H1p, H2p)
    return padded, meta


def _ractor_pallas(x, pp, meta, tile_b):
    K, A, Kp, H1p, H2p = meta
    B, Kx = x.shape
    assert Kx == K, f"state dim mismatch: {Kx} vs {K}"

    # Balanced batch tiling: minimize padding, and keep >=2 grid steps on big batches so
    # dimension_semantics=("parallel",) can shard tiles across both v7x TensorCores.
    Bp0 = _round_up(B, SUB_B)
    tb_cap = min(tile_b, max(_round_up(pl.cdiv(Bp0, 2), SUB_B), SUB_B))
    n_tiles = max(pl.cdiv(Bp0, tb_cap), 1)
    tb = _round_up(pl.cdiv(Bp0, n_tiles), SUB_B)
    Bp = tb * n_tiles

    # Pad batch + fan-in and cast to bf16 (fuses with neighbors under jit).
    xp = jnp.pad(x, ((0, Bp - B), (0, Kp - K))).astype(jnp.bfloat16)

    vmem = pltpu.MemorySpace.VMEM

    def resident(shape):
        # Constant block index across the grid -> stays VMEM-resident (no re-DMA per step).
        return pl.BlockSpec(shape, lambda i: (0, 0), memory_space=vmem)

    in_specs = [
        pl.BlockSpec((tb, Kp), lambda i: (i, 0), memory_space=vmem),   # x tile (streamed)
        resident((Kp, H1p)), resident((1, H1p)),                       # W1, b1
        resident((H1p, H2p)), resident((1, H2p)),                      # W2, b2
        resident((H2p, A)), resident((1, A)),                          # W3, b3
    ]
    out_specs = pl.BlockSpec((tb, A), lambda i: (i, 0), memory_space=vmem)

    flops = 2 * Bp * (Kp * H1p + H1p * H2p + H2p * A)
    bytes_accessed = (2 * Bp * Kp + 4 * Bp * A                    # bf16 x in, f32 logits out
                      + 2 * (Kp * H1p + H1p * H2p + H2p * A)      # bf16 weights
                      + 4 * (H1p + H2p + A))                      # f32 biases
    cost = pl.CostEstimate(flops=flops, transcendentals=0, bytes_accessed=bytes_accessed)

    out = pl.pallas_call(
        ractor_kernel,
        out_shape=jax.ShapeDtypeStruct((Bp, A), jnp.float32),
        grid=(n_tiles,),
        in_specs=in_specs,
        out_specs=out_specs,
        compiler_params=pltpu.CompilerParams(
            dimension_semantics=("parallel",),      # shard batch tiles across TCs (v7x)
            vmem_limit_bytes=32 * 1024 * 1024,      # tb<=4096 working set is < 1 MiB; safe on v5e too
        ),
        cost_estimate=cost,
    )(xp, pp["W1"], pp["b1"], pp["W2"], pp["b2"], pp["W3"], pp["b3"])

    # Drop batch padding only (output was already stored at its true width A).
    return out[:B] if Bp != B else out


def make_ractor_forward(params, *, tile_b=4096):
    """Pad/cast params once and return a jitted forward: (B, state_size) f32 -> (B, action_size) f32."""
    pp, meta = _pad_params(params)

    @jax.jit
    def fwd(x, pp):
        return _ractor_pallas(x, pp, meta, tile_b)

    return functools.partial(fwd, pp=pp)


def init_params(key, state_size, action_size, fc1_units=64, fc2_units=64):
    """Deterministic init mimicking PyTorch nn.Linear default (uniform +-1/sqrt(fan_in))."""
    def linear(k, fan_in, fan_out):
        kw, kb = jax.random.split(k)
        bound = 1.0 / jnp.sqrt(jnp.float32(fan_in))
        W = jax.random.uniform(kw, (fan_in, fan_out), jnp.float32, -bound, bound)
        b = jax.random.uniform(kb, (1, fan_out), jnp.float32, -bound, bound)
        return W, b

    k1, k2, k3 = jax.random.split(key, 3)
    W1, b1 = linear(k1, state_size, fc1_units)
    W2, b2 = linear(k2, fc1_units, fc2_units)
    W3, b3 = linear(k3, fc2_units, action_size)
    return {"W1": W1, "b1": b1, "W2": W2, "b2": b2, "W3": W3, "b3": b3}


if __name__ == "__main__":
    key = jax.random.PRNGKey(0)
    k_params, k_x, k_x2 = jax.random.split(key, 3)

    batch = 8
    state_size = 16
    action_size = 8

    params = init_params(k_params, state_size, action_size)

    def ref_fwd(x):  # plain f32 reference (unpadded weights)
        h = jnp.maximum(x @ params["W1"] + params["b1"], 0.0)
        h = jnp.maximum(h @ params["W2"] + params["b2"], 0.0)
        return h @ params["W3"] + params["b3"]

    # Single-tile acting path (B=8).
    fwd = make_ractor_forward(params, tile_b=4096)
    x = jax.random.normal(k_x, (batch, state_size), jnp.float32)
    out = jax.block_until_ready(fwd(x))
    assert out.shape == (batch, action_size)
    # bf16 MXU operands -> loose tolerance vs the f32 reference.
    assert jnp.allclose(out, ref_fwd(x), atol=5e-2, rtol=5e-2), "mismatch vs reference (B=8)"

    # Multi-tile path: exercises the 1-D grid, balanced tiling, and batch padding.
    fwd_small_tiles = make_ractor_forward(params, tile_b=16)
    x2 = jax.random.normal(k_x2, (40, state_size), jnp.float32)
    out2 = jax.block_until_ready(fwd_small_tiles(x2))
    assert out2.shape == (40, action_size)
    assert jnp.allclose(out2, ref_fwd(x2), atol=5e-2, rtol=5e-2), "mismatch vs reference (B=40)"

    print("KERNEL_OK")
</pallas_src>

<mosaic_0001>
module attributes {stable_mosaic.version = 11 : i64} {
  func.func @ractor_kernel(%arg0: i32, %arg1: memref<16x16xbf16, #tpu.memory_space<vmem>>, %arg2: memref<16x128xbf16, #tpu.memory_space<vmem>>, %arg3: memref<1x128xf32, #tpu.memory_space<vmem>>, %arg4: memref<128x128xbf16, #tpu.memory_space<vmem>>, %arg5: memref<1x128xf32, #tpu.memory_space<vmem>>, %arg6: memref<128x8xbf16, #tpu.memory_space<vmem>>, %arg7: memref<1x8xf32, #tpu.memory_space<vmem>>, %arg8: memref<16x8xf32, #tpu.memory_space<vmem>>) attributes {dimension_semantics = [#tpu.dimension_semantics<parallel>], iteration_bounds = array<i64: 1>, scalar_prefetch = 0 : i64, scratch_operands = 0 : i64, tpu.core_type = #tpu.core_type<tc>, window_params = [{transform_indices = @transform_0, window_bounds = array<i64: 16, 16>}, {pipeline_mode = #tpu.pipeline_mode<synchronous>, transform_indices = @transform_1, window_bounds = array<i64: 16, 128>}, {pipeline_mode = #tpu.pipeline_mode<synchronous>, transform_indices = @transform_2, window_bounds = array<i64: 1, 128>}, {pipeline_mode = #tpu.pipeline_mode<synchronous>, transform_indices = @transform_3, window_bounds = array<i64: 128, 128>}, {pipeline_mode = #tpu.pipeline_mode<synchronous>, transform_indices = @transform_4, window_bounds = array<i64: 1, 128>}, {pipeline_mode = #tpu.pipeline_mode<synchronous>, transform_indices = @transform_5, window_bounds = array<i64: 128, 8>}, {pipeline_mode = #tpu.pipeline_mode<synchronous>, transform_indices = @transform_6, window_bounds = array<i64: 1, 8>}, {transform_indices = @transform_7, window_bounds = array<i64: 16, 8>}]} {
    %c0 = arith.constant 0 : index
    %c0_0 = arith.constant 0 : index
    %0 = vector.load %arg1[%c0, %c0_0] : memref<16x16xbf16, #tpu.memory_space<vmem>>, vector<16x16xbf16>
    %c0_1 = arith.constant 0 : index
    %c0_2 = arith.constant 0 : index
    %1 = vector.load %arg2[%c0_1, %c0_2] : memref<16x128xbf16, #tpu.memory_space<vmem>>, vector<16x128xbf16>
    %cst = arith.constant dense<0.000000e+00> : vector<16x128xf32>
    %2 = tpu.matmul %0, %1, %cst {dimension_numbers = #tpu.dot_dimension_numbers<[1], [0], [0], [1], [0, 0, 1, 1], [], []>} : vector<16x16xbf16>, vector<16x128xbf16>, vector<16x128xf32> -> vector<16x128xf32>
    %c0_3 = arith.constant 0 : index
    %c0_4 = arith.constant 0 : index
    %3 = vector.load %arg3[%c0_3, %c0_4] : memref<1x128xf32, #tpu.memory_space<vmem>>, vector<1x128xf32>
    %4 = vector.broadcast %3 : vector<1x128xf32> to vector<16x128xf32>
    %5 = arith.addf %2, %4 : vector<16x128xf32>
    %cst_5 = arith.constant 0.000000e+00 : f32
    %6 = vector.broadcast %cst_5 : f32 to vector<16x128xf32>
    %7 = arith.maximumf %5, %6 : vector<16x128xf32>
    %8 = arith.truncf %7 : vector<16x128xf32> to vector<16x128xbf16>
    %c0_6 = arith.constant 0 : index
    %c0_7 = arith.constant 0 : index
    %9 = vector.load %arg4[%c0_6, %c0_7] : memref<128x128xbf16, #tpu.memory_space<vmem>>, vector<128x128xbf16>
    %cst_8 = arith.constant dense<0.000000e+00> : vector<16x128xf32>
    %10 = tpu.matmul %8, %9, %cst_8 {dimension_numbers = #tpu.dot_dimension_numbers<[1], [0], [0], [1], [0, 0, 1, 1], [], []>} : vector<16x128xbf16>, vector<128x128xbf16>, vector<16x128xf32> -> vector<16x128xf32>
    %c0_9 = arith.constant 0 : index
    %c0_10 = arith.constant 0 : index
    %11 = vector.load %arg5[%c0_9, %c0_10] : memref<1x128xf32, #tpu.memory_space<vmem>>, vector<1x128xf32>
    %12 = vector.broadcast %11 : vector<1x128xf32> to vector<16x128xf32>
    %13 = arith.addf %10, %12 : vector<16x128xf32>
    %cst_11 = arith.constant 0.000000e+00 : f32
    %14 = vector.broadcast %cst_11 : f32 to vector<16x128xf32>
    %15 = arith.maximumf %13, %14 : vector<16x128xf32>
    %16 = arith.truncf %15 : vector<16x128xf32> to vector<16x128xbf16>
    %c0_12 = arith.constant 0 : index
    %c0_13 = arith.constant 0 : index
    %17 = vector.load %arg6[%c0_12, %c0_13] : memref<128x8xbf16, #tpu.memory_space<vmem>>, vector<128x8xbf16>
    %cst_14 = arith.constant dense<0.000000e+00> : vector<16x8xf32>
    %18 = tpu.matmul %16, %17, %cst_14 {dimension_numbers = #tpu.dot_dimension_numbers<[1], [0], [0], [1], [0, 0, 1, 1], [], []>} : vector<16x128xbf16>, vector<128x8xbf16>, vector<16x8xf32> -> vector<16x8xf32>
    %c0_15 = arith.constant 0 : index
    %c0_16 = arith.constant 0 : index
    %19 = vector.load %arg7[%c0_15, %c0_16] : memref<1x8xf32, #tpu.memory_space<vmem>>, vector<1x8xf32>
    %20 = vector.broadcast %19 : vector<1x8xf32> to vector<16x8xf32>
    %21 = arith.addf %18, %20 : vector<16x8xf32>
    %c0_17 = arith.constant 0 : index
    %c0_18 = arith.constant 0 : index
    %22 = vector.load %arg8[%c0_17, %c0_18] : memref<16x8xf32, #tpu.memory_space<vmem>>, vector<16x8xf32>
    tpu.vector_store %arg8[%c0_17, %c0_18], %21 {strides = array<i32>} : memref<16x8xf32, #tpu.memory_space<vmem>>, vector<16x8xf32>,
    return
  }
  func.func @transform_0(%arg0: i32) -> (i32, i32) {
    %c0_i32 = arith.constant 0 : i32
    %c0_i32_0 = arith.constant 0 : i32
    return %arg0, %c0_i32 : i32, i32
  }
  func.func @transform_1(%arg0: i32) -> (i32, i32) {
    %c0_i32 = arith.constant 0 : i32
    %c0_i32_0 = arith.constant 0 : i32
    %c0_i32_1 = arith.constant 0 : i32
    return %c0_i32, %c0_i32_0 : i32, i32
  }
  func.func @transform_2(%arg0: i32) -> (i32, i32) {
    %c0_i32 = arith.constant 0 : i32
    %c0_i32_0 = arith.constant 0 : i32
    %c0_i32_1 = arith.constant 0 : i32
    return %c0_i32, %c0_i32_0 : i32, i32
  }
  func.func @transform_3(%arg0: i32) -> (i32, i32) {
    %c0_i32 = arith.constant 0 : i32
    %c0_i32_0 = arith.constant 0 : i32
    %c0_i32_1 = arith.constant 0 : i32
    return %c0_i32, %c0_i32_0 : i32, i32
  }
  func.func @transform_4(%arg0: i32) -> (i32, i32) {
    %c0_i32 = arith.constant 0 : i32
    %c0_i32_0 = arith.constant 0 : i32
    %c0_i32_1 = arith.constant 0 : i32
    return %c0_i32, %c0_i32_0 : i32, i32
  }
  func.func @transform_5(%arg0: i32) -> (i32, i32) {
    %c0_i32 = arith.constant 0 : i32
    %c0_i32_0 = arith.constant 0 : i32
    %c0_i32_1 = arith.constant 0 : i32
    return %c0_i32, %c0_i32_0 : i32, i32
  }
  func.func @transform_6(%arg0: i32) -> (i32, i32) {
    %c0_i32 = arith.constant 0 : i32
    %c0_i32_0 = arith.constant 0 : i32
    %c0_i32_1 = arith.constant 0 : i32
    return %c0_i32, %c0_i32_0 : i32, i32
  }
  func.func @transform_7(%arg0: i32) -> (i32, i32) {
    %c0_i32 = arith.constant 0 : i32
    %c0_i32_0 = arith.constant 0 : i32
    return %arg0, %c0_i32 : i32, i32
  }
}

</mosaic_0001>

<llo_original>
// kernel: fwd.1
$region0: #{fwd.1}
  #allocation0 [shape = 'u32[]', space=smem, size = 0x4, offset = 0x4, fixed_abs, tag = 'smem constant byte address 0x4 - core index']
  #allocation1 [shape = 'u32[72,128]{1,0:T(1,128)}', space=vmem, size = 0x9000, scoped, tag = 'internal scratch']
  %s0 = inlined_call_operand.vmem [shape: bf16[16,16], index: 0, kind: input, shape index: {}]
  %s1 = inlined_call_operand.vmem [shape: bf16[16,128], index: 1, kind: input, shape index: {}]
  %s2 = inlined_call_operand.vmem [shape: f32[1,128], index: 2, kind: input, shape index: {}]
  %s3 = inlined_call_operand.vmem [shape: bf16[128,128], index: 3, kind: input, shape index: {}]
  %s4 = inlined_call_operand.vmem [shape: f32[1,128], index: 4, kind: input, shape index: {}]
  %s5 = inlined_call_operand.vmem [shape: bf16[128,8], index: 5, kind: input, shape index: {}]
  %s6 = inlined_call_operand.vmem [shape: f32[1,8], index: 6, kind: input, shape index: {}]
  %s7 = inlined_call_operand.vmem [shape: f32[16,8], index: 7, kind: output, shape index: {}]
  %s8 = sld [smem:[#allocation0]]
  $region38: #{fwd.1} parent=0
    _
  %s10 = ssub.s32 1, %s8
  %s11 = scalar_select 0, %s10, %s8
  // Predicated region
  $region2: #{fwd.1} parent=0 // pred_check
    _
  $region3: #{fwd.1} parent=0 // pred_check_branch
    %13 = sbr.rel (0) target = $region5
  $region4: #{fwd.1} parent=0 // pred_region
    _
  $region5: #{fwd.1} parent=0 // pred_fallthru
    _
  // Predicated region
  $region6: #{fwd.1} parent=0 // pred_check
    _
  $region7: #{fwd.1} parent=0 // pred_check_branch
    %15 = sbr.rel (0) target = $region9
  $region8: #{fwd.1} parent=0 // pred_region
    _
  $region9: #{fwd.1} parent=0 // pred_fallthru
    _
  // Predicated region
  $region10: #{fwd.1} parent=0 // pred_check
    _
  $region11: #{fwd.1} parent=0 // pred_check_branch
    %17 = sbr.rel (0) target = $region13
  $region12: #{fwd.1} parent=0 // pred_region
    _
  $region13: #{fwd.1} parent=0 // pred_fallthru
    _
  // Predicated region
  $region14: #{fwd.1} parent=0 // pred_check
    _
  $region15: #{fwd.1} parent=0 // pred_check_branch
    %19 = sbr.rel (0) target = $region17
  $region16: #{fwd.1} parent=0 // pred_region
    _
  $region17: #{fwd.1} parent=0 // pred_fallthru
    _
  // Predicated region
  $region18: #{fwd.1} parent=0 // pred_check
    _
  $region19: #{fwd.1} parent=0 // pred_check_branch
    %21 = sbr.rel (0) target = $region21
  $region20: #{fwd.1} parent=0 // pred_region
    _
  $region21: #{fwd.1} parent=0 // pred_fallthru
    _
  // Predicated region
  $region22: #{fwd.1} parent=0 // pred_check
    _
  $region23: #{fwd.1} parent=0 // pred_check_branch
    %23 = sbr.rel (0) target = $region25
  $region24: #{fwd.1} parent=0 // pred_region
    _
  $region25: #{fwd.1} parent=0 // pred_fallthru
    _
  // Predicated region
  $region26: #{fwd.1} parent=0 // pred_check
    _
  $region27: #{fwd.1} parent=0 // pred_check_branch
    %25 = sbr.rel (0) target = $region29
  $region28: #{fwd.1} parent=0 // pred_region
    _
  $region29: #{fwd.1} parent=0 // pred_fallthru
    _
  %v27 = vld [vmem:[%s0] sm:$0xf]
  %v28 = vld [vmem:[%s0 + $0x4] sm:$0xf]
  %v29 = vld [vmem:[%s1] sm:$0xf]
  %v30 = vld [vmem:[%s1 + $0x4] sm:$0xf]
  %v31 = vld [vmem:[%s2] sm:$0x1]
  %v33 = vperm.slane %v31, 0
  %v37 = vunpack.c.l.b16 %v27
  %v38 = vunpack.c.l.b16 %v28
  %v39 = vpack.c.b16 %v38, %v37
  %v42 = vunpack.c.l.b16 %v29
  %v43 = vunpack.c.l.b16 %v30
  %v44 = vpack.c.b16 %v43, %v42
  %vm46 = vcmask 130048
  %v48 = vsel %vm46, %v39, 0
  %50 = vmatpush.bf16.msra.mxu0 0
  %51 = vmatpush.bf16.msra.mxu0 0
  %52 = vmatpush.bf16.msra.mxu0 0
  %53 = vmatpush.bf16.msra.mxu0 0
  %54 = vmatpush.bf16.msra.mxu0 0
  %55 = vmatpush.bf16.msra.mxu0 0
  %56 = vmatpush.bf16.msra.mxu0 0
  %57 = vmatpush.bf16.msra.mxu0 %v44
  %58 = vmatmul.bf16.gmra.mxu0 %v48
  %v59 = vpop.f32.mrf.mxu0
  %v60 = vadd.f32 %v33, %v59
  %v61 = vpop.f32.mrf.mxu0
  %v62 = vadd.f32 %v33, %v61
  %63 = vdwg.mxu0
  %v64 = vmax.f32 %v60, 0.0
  %v65 = vmax.f32 %v62, 0.0
  %v66 = vpack.c.bf16 %v65, %v64
  %v67 = vld [vmem:[%s3] sm:$0xf]
  %v68 = vld [vmem:[%s3 + $0x4] sm:$0xf]
  %v69 = vld [vmem:[%s3 + $0x8] sm:$0xf]
  %v70 = vld [vmem:[%s3 + $0xc] sm:$0xf]
  %v71 = vld [vmem:[%s3 + $0x10] sm:$0xf]
  %v72 = vld [vmem:[%s3 + $0x14] sm:$0xf]
  %v73 = vld [vmem:[%s3 + $0x18] sm:$0xf]
  %v74 = vld [vmem:[%s3 + $0x1c] sm:$0xf]
  %v75 = vld [vmem:[%s3 + $0x20] sm:$0xf]
  %v76 = vld [vmem:[%s3 + $0x24] sm:$0xf]
  %v77 = vld [vmem:[%s3 + $0x28] sm:$0xf]
  %v78 = vld [vmem:[%s3 + $0x2c] sm:$0xf]
  %v79 = vld [vmem:[%s3 + $0x30] sm:$0xf]
  %v80 = vld [vmem:[%s3 + $0x34] sm:$0xf]
  %v81 = vld [vmem:[%s3 + $0x38] sm:$0xf]
  %v82 = vld [vmem:[%s3 + $0x3c] sm:$0xf]
  %v83 = vld [vmem:[%s4] sm:$0x1]
  %v85 = vperm.slane %v83, 0
  %v103 = vunpack.c.l.b16 %v67
  %v104 = vunpack.c.l.b16 %v68
  %v105 = vunpack.c.l.b16 %v69
  %v106 = vunpack.c.l.b16 %v70
  %v107 = vunpack.c.l.b16 %v71
  %v108 = vunpack.c.l.b16 %v72
  %v109 = vunpack.c.l.b16 %v73
  %v110 = vunpack.c.l.b16 %v74
  %v111 = vunpack.c.l.b16 %v75
  %v112 = vunpack.c.l.b16 %v76
  %v113 = vunpack.c.l.b16 %v77
  %v114 = vunpack.c.l.b16 %v78
  %v115 = vunpack.c.l.b16 %v79
  %v116 = vunpack.c.l.b16 %v80
  %v117 = vunpack.c.l.b16 %v81
  %v118 = vunpack.c.l.b16 %v82
  %v119 = vpack.c.b16 %v104, %v103
  %v120 = vpack.c.b16 %v106, %v105
  %v121 = vpack.c.b16 %v108, %v107
  %v122 = vpack.c.b16 %v110, %v109
  %v123 = vpack.c.b16 %v112, %v111
  %v124 = vpack.c.b16 %v114, %v113
  %v125 = vpack.c.b16 %v116, %v115
  %v126 = vpack.c.b16 %v118, %v117
  %135 = vmatpush.bf16.msra.mxu0 %v126
  %136 = vmatpush.bf16.msra.mxu0 %v125
  %137 = vmatpush.bf16.msra.mxu0 %v124
  %138 = vmatpush.bf16.msra.mxu0 %v123
  %139 = vmatpush.bf16.msra.mxu0 %v122
  %140 = vmatpush.bf16.msra.mxu0 %v121
  %141 = vmatpush.bf16.msra.mxu0 %v120
  %142 = vmatpush.bf16.msra.mxu0 %v119
  %143 = vmatmul.bf16.gmra.mxu0 %v66
  %v144 = vpop.f32.mrf.mxu0
  %v145 = vadd.f32 %v85, %v144
  %v146 = vpop.f32.mrf.mxu0
  %v147 = vadd.f32 %v85, %v146
  %148 = vdwg.mxu0
  %v149 = vmax.f32 %v145, 0.0
  %v150 = vmax.f32 %v147, 0.0
  %v151 = vpack.c.bf16 %v150, %v149
  %v152 = vld [vmem:[%s5] sm:$0xf]
  %v153 = vld [vmem:[%s5 + $0x4] sm:$0xf]
  %v154 = vld [vmem:[%s5 + $0x8] sm:$0xf]
  %v155 = vld [vmem:[%s5 + $0xc] sm:$0xf]
  %v156 = vld [vmem:[%s5 + $0x10] sm:$0xf]
  %v157 = vld [vmem:[%s5 + $0x14] sm:$0xf]
  %v158 = vld [vmem:[%s5 + $0x18] sm:$0xf]
  %v159 = vld [vmem:[%s5 + $0x1c] sm:$0xf]
  %v160 = vld [vmem:[%s5 + $0x20] sm:$0xf]
  %v161 = vld [vmem:[%s5 + $0x24] sm:$0xf]
  %v162 = vld [vmem:[%s5 + $0x28] sm:$0xf]
  %v163 = vld [vmem:[%s5 + $0x2c] sm:$0xf]
  %v164 = vld [vmem:[%s5 + $0x30] sm:$0xf]
  %v165 = vld [vmem:[%s5 + $0x34] sm:$0xf]
  %v166 = vld [vmem:[%s5 + $0x38] sm:$0xf]
  %v167 = vld [vmem:[%s5 + $0x3c] sm:$0xf]
  %v168 = vld [vmem:[%s6] sm:$0x1]
  %v170 = vperm.slane %v168, 0
  %v188 = vunpack.c.l.b16 %v152
  %v189 = vunpack.c.l.b16 %v153
  %v190 = vunpack.c.l.b16 %v154
  %v191 = vunpack.c.l.b16 %v155
  %v192 = vunpack.c.l.b16 %v156
  %v193 = vunpack.c.l.b16 %v157
  %v194 = vunpack.c.l.b16 %v158
  %v195 = vunpack.c.l.b16 %v159
  %v196 = vunpack.c.l.b16 %v160
  %v197 = vunpack.c.l.b16 %v161
  %v198 = vunpack.c.l.b16 %v162
  %v199 = vunpack.c.l.b16 %v163
  %v200 = vunpack.c.l.b16 %v164
  %v201 = vunpack.c.l.b16 %v165
  %v202 = vunpack.c.l.b16 %v166
  %v203 = vunpack.c.l.b16 %v167
  %v204 = vpack.c.b16 %v189, %v188
  %v205 = vpack.c.b16 %v191, %v190
  %v206 = vpack.c.b16 %v193, %v192
  %v207 = vpack.c.b16 %v195, %v194
  %v208 = vpack.c.b16 %v197, %v196
  %v209 = vpack.c.b16 %v199, %v198
  %v210 = vpack.c.b16 %v201, %v200
  %v211 = vpack.c.b16 %v203, %v202
  %220 = vmatpush.bf16.msra.mxu0 %v211
  %221 = vmatpush.bf16.msra.mxu0 %v210
  %222 = vmatpush.bf16.msra.mxu0 %v209
  %223 = vmatpush.bf16.msra.mxu0 %v208
  %224 = vmatpush.bf16.msra.mxu0 %v207
  %225 = vmatpush.bf16.msra.mxu0 %v206
  %226 = vmatpush.bf16.msra.mxu0 %v205
  %227 = vmatpush.bf16.msra.mxu0 %v204
  %228 = vmatmul.bf16.gmra.mxu0 %v151
  %v229 = vpop.f32.mrf.mxu0
  %v230 = vadd.f32 %v170, %v229
  %v231 = vpop.f32.mrf.mxu0
  %v232 = vadd.f32 %v170, %v231
  %233 = vdwg.mxu0
  %vm234 = vcmask 64512
  %235 = vst.msk [vmem:[%s7] sm:$0xff] %vm234, %v230
  %236 = vst.msk [vmem:[%s7 + $0x8] sm:$0xff] %vm234, %v232
  // Predicated region
  $region30: #{fwd.1} parent=0 // pred_check
    _
  $region31: #{fwd.1} parent=0 // pred_check_branch
    %238 = sbr.rel (0) target = $region33
  $region32: #{fwd.1} parent=0 // pred_region
    _
  $region33: #{fwd.1} parent=0 // pred_fallthru
    _
  // Predicated region
  $region34: #{fwd.1} parent=0 // pred_check
    _
  $region35: #{fwd.1} parent=0 // pred_check_branch
    %240 = sbr.rel (0) target = $region37
  $region36: #{fwd.1} parent=0 // pred_region
    _
  $region37: #{fwd.1} parent=0 // pred_fallthru
    _

</llo_original>
